<compile_context>
chip_gen: v5e
topology: v5e:2x2
jax: 0.10.0
libtpu: 0.0.40
codegen_flags: <defaults>
</compile_context>

<pallas_src>
import functools

import numpy as np
import jax
import jax.numpy as jnp
from jax.experimental import pallas as pl
from jax.experimental.pallas import tpu as pltpu


def _round_up(x, m):
    return ((x + m - 1) // m) * m


def _cb_ce_kernel(logits_ref, targets_ref, weights_ref, out_ref,
                  loss_acc_ref, wsum_acc_ref, *, n_valid):
    pid = pl.program_id(0)

    @pl.when(pid == 0)
    def _():
        loss_acc_ref[...] = jnp.zeros_like(loss_acc_ref)
        wsum_acc_ref[...] = jnp.zeros_like(wsum_acc_ref)

    # Upcast after load: DMA moves native dtype, math is f32 (safe on v5e too).
    logits = logits_ref[...].astype(jnp.float32)      # (C, T)  classes x samples
    targets = targets_ref[...]                        # (1, T)  int32
    w = weights_ref[...]                              # (C, 1)  f32

    c, t = logits.shape

    # Mask off padded tail samples (global sample index >= n_valid).
    lane = jax.lax.broadcasted_iota(jnp.int32, (1, t), 1)
    valid = ((pid * t + lane) < n_valid).astype(jnp.float32)       # (1, T)

    # Numerically-stable log-softmax over classes (sublane axis, C rows).
    m = jnp.max(logits, axis=0, keepdims=True)                     # (1, T)
    z = logits - m                                                 # (C, T)
    lse = jnp.log(jnp.sum(jnp.exp(z), axis=0, keepdims=True))      # (1, T)

    # One-hot of targets via broadcasted iota (no cross-lane gather needed).
    class_ids = jax.lax.broadcasted_iota(jnp.int32, (c, t), 0)     # (C, T)
    onehot = (class_ids == targets).astype(jnp.float32)            # (C, T)

    target_z = jnp.sum(onehot * z, axis=0, keepdims=True)          # (1, T)
    nll = lse - target_z                                           # (1, T) = -log p[target]
    w_t = jnp.sum(onehot * w, axis=0, keepdims=True) * valid       # (1, T)

    loss_acc_ref[...] += jnp.sum(w_t * nll, axis=1, keepdims=True)
    wsum_acc_ref[...] += jnp.sum(w_t, axis=1, keepdims=True)

    @pl.when(pid == pl.num_programs(0) - 1)
    def _():
        # PyTorch 'mean' with class weights divides by the sum of picked weights.
        out_ref[...] = loss_acc_ref[...] / wsum_acc_ref[...]


def class_balanced_cross_entropy(logits, targets, class_weights, *, tile_n=512):
    """logits: (N, C) any float dtype, targets: (N,) int, class_weights: (C,) f32."""
    n, c = logits.shape
    tile_n = min(tile_n, _round_up(n, 128))
    n_pad = _round_up(n, tile_n)

    # Lane-dense layout: classes on sublanes, samples on lanes. Native dtype
    # (no f32 cast in the wrapper) -- the kernel upcasts after the load.
    logits_t = jnp.transpose(logits)                    # (C, N)
    targets_i = targets.astype(jnp.int32)
    if n_pad != n:
        logits_t = jnp.pad(logits_t, ((0, 0), (0, n_pad - n)))
        targets_i = jnp.pad(targets_i, (0, n_pad - n))
    targets_2d = targets_i.reshape(1, n_pad)            # (1, N_pad) lane-dense
    weights_2d = class_weights.astype(jnp.float32).reshape(c, 1)   # (C, 1)

    grid = (n_pad // tile_n,)
    kernel = functools.partial(_cb_ce_kernel, n_valid=n)

    # TODO(synk): on v7x (2 TensorCores) split the N axis into per-core partial
    # (loss_sum, w_sum) outputs instead of a single shared accumulator.
    out = pl.pallas_call(
        kernel,
        out_shape=jax.ShapeDtypeStruct((1, 1), jnp.float32),
        grid_spec=pltpu.PrefetchScalarGridSpec(
            num_scalar_prefetch=0,
            grid=grid,
            in_specs=[
                pl.BlockSpec((c, tile_n), lambda i: (0, i)),   # logits tile
                pl.BlockSpec((1, tile_n), lambda i: (0, i)),   # targets tile
                pl.BlockSpec((c, 1), lambda i: (0, 0)),        # weights, resident
            ],
            out_specs=pl.BlockSpec((1, 1), lambda i: (0, 0)),
            scratch_shapes=[
                pltpu.VMEM((1, 1), jnp.float32),   # running sum(w_t * nll)
                pltpu.VMEM((1, 1), jnp.float32),   # running sum(w_t)
            ],
        ),
        compiler_params=pltpu.CompilerParams(
            dimension_semantics=("arbitrary",),    # reduction axis feeds accumulator
        ),
    )(logits_t, targets_2d, weights_2d)
    return out[0, 0]


def make_class_weights(num_classes, samples_per_class, beta=0.999):
    """Deterministic class-balanced weights, same math as the torch module."""
    samples_per_class = np.asarray(samples_per_class)
    assert len(samples_per_class) == num_classes
    effective_num = 1.0 - np.power(beta, samples_per_class)
    weights = (1.0 - beta) / effective_num
    weights = weights / np.sum(weights) * num_classes
    return jnp.asarray(weights, dtype=jnp.float32)


def _reference_loss(logits, targets, class_weights):
    # pure-JAX reference of F.cross_entropy(weight=w, reduction='mean')
    logp = jax.nn.log_softmax(logits.astype(jnp.float32), axis=-1)
    picked = jnp.take_along_axis(logp, targets[:, None], axis=-1)[:, 0]
    w_t = class_weights[targets]
    return jnp.sum(-picked * w_t) / jnp.sum(w_t)


if __name__ == "__main__":
    num_classes = 4
    samples_per_class = [500, 120, 40, 10]   # imbalanced class counts
    class_weights = make_class_weights(num_classes, samples_per_class, beta=0.999)

    key = jax.random.PRNGKey(0)

    # Case 1: small batch, single tile.
    k1, k2, k3, k4 = jax.random.split(key, 4)
    logits_a = jax.random.normal(k1, (8, num_classes), dtype=jnp.float32)
    targets_a = jax.random.randint(k2, (8,), 0, num_classes, dtype=jnp.int32)
    loss_a = jax.block_until_ready(
        class_balanced_cross_entropy(logits_a, targets_a, class_weights))
    ref_a = jax.block_until_ready(_reference_loss(logits_a, targets_a, class_weights))
    assert np.allclose(np.asarray(loss_a), np.asarray(ref_a), rtol=1e-5, atol=1e-5), (loss_a, ref_a)

    # Case 2: multi-tile grid with a masked padded tail (N=300, tile_n=128 -> grid=3).
    logits_b = jax.random.normal(k3, (300, num_classes), dtype=jnp.float32)
    targets_b = jax.random.randint(k4, (300,), 0, num_classes, dtype=jnp.int32)
    loss_b = jax.block_until_ready(
        class_balanced_cross_entropy(logits_b, targets_b, class_weights, tile_n=128))
    ref_b = jax.block_until_ready(_reference_loss(logits_b, targets_b, class_weights))
    assert np.allclose(np.asarray(loss_b), np.asarray(ref_b), rtol=1e-5, atol=1e-5), (loss_b, ref_b)

    print("KERNEL_OK")
</pallas_src>

<mosaic_0001>
module attributes {stable_mosaic.version = 11 : i64} {
  func.func @_cb_ce_kernel(%arg0: i32, %arg1: memref<4x128xf32, #tpu.memory_space<vmem>>, %arg2: memref<1x128xi32, #tpu.memory_space<vmem>>, %arg3: memref<4x1xf32, #tpu.memory_space<vmem>>, %arg4: memref<1x1xf32, #tpu.memory_space<vmem>>, %arg5: memref<1x1xf32, #tpu.memory_space<vmem>>, %arg6: memref<1x1xf32, #tpu.memory_space<vmem>>) attributes {dimension_semantics = [#tpu.dimension_semantics<arbitrary>], iteration_bounds = array<i64: 1>, scalar_prefetch = 0 : i64, scratch_operands = 2 : i64, tpu.core_type = #tpu.core_type<tc>, window_params = [{transform_indices = @transform_0, window_bounds = array<i64: 4, 128>}, {transform_indices = @transform_1, window_bounds = array<i64: 1, 128>}, {pipeline_mode = #tpu.pipeline_mode<synchronous>, transform_indices = @transform_2, window_bounds = array<i64: 4, 1>}, {pipeline_mode = #tpu.pipeline_mode<synchronous>, transform_indices = @transform_3, window_bounds = array<i64: 1, 1>}]} {
    %c0_i32 = arith.constant 0 : i32
    %0 = arith.cmpi eq, %arg0, %c0_i32 : i32
    %1 = arith.extui %0 : i1 to i32
    %c0_i32_0 = arith.constant 0 : i32
    %2 = arith.cmpi ne, %1, %c0_i32_0 : i32
    scf.if %2 {
      %cst_21 = arith.constant 0.000000e+00 : f32
      %50 = vector.broadcast %cst_21 : f32 to vector<1x1xf32>
      %c0_22 = arith.constant 0 : index
      %c0_23 = arith.constant 0 : index
      %51 = vector.load %arg5[%c0_22, %c0_23] : memref<1x1xf32, #tpu.memory_space<vmem>>, vector<1x1xf32>
      tpu.vector_store %arg5[%c0_22, %c0_23], %50 {strides = array<i32>} : memref<1x1xf32, #tpu.memory_space<vmem>>, vector<1x1xf32>,
      %cst_24 = arith.constant 0.000000e+00 : f32
      %52 = vector.broadcast %cst_24 : f32 to vector<1x1xf32>
      %c0_25 = arith.constant 0 : index
      %c0_26 = arith.constant 0 : index
      %53 = vector.load %arg6[%c0_25, %c0_26] : memref<1x1xf32, #tpu.memory_space<vmem>>, vector<1x1xf32>
      tpu.vector_store %arg6[%c0_25, %c0_26], %52 {strides = array<i32>} : memref<1x1xf32, #tpu.memory_space<vmem>>, vector<1x1xf32>,
    } else {
    }
    %c0 = arith.constant 0 : index
    %c0_1 = arith.constant 0 : index
    %3 = vector.load %arg1[%c0, %c0_1] : memref<4x128xf32, #tpu.memory_space<vmem>>, vector<4x128xf32>
    %c0_2 = arith.constant 0 : index
    %c0_3 = arith.constant 0 : index
    %4 = vector.load %arg2[%c0_2, %c0_3] : memref<1x128xi32, #tpu.memory_space<vmem>>, vector<1x128xi32>
    %c0_4 = arith.constant 0 : index
    %c0_5 = arith.constant 0 : index
    %5 = vector.load %arg3[%c0_4, %c0_5] : memref<4x1xf32, #tpu.memory_space<vmem>>, vector<4x1xf32>
    %6 = tpu.iota {dimensions = array<i32: 1>} : vector<1x128xi32>
    %c128_i32 = arith.constant 128 : i32
    %7 = arith.muli %arg0, %c128_i32 : i32
    %8 = vector.broadcast %7 : i32 to vector<1x128xi32>
    %9 = arith.addi %8, %6 : vector<1x128xi32>
    %c8_i32 = arith.constant 8 : i32
    %10 = vector.broadcast %c8_i32 : i32 to vector<1x128xi32>
    %11 = arith.cmpi slt, %9, %10 : vector<1x128xi32>
    %12 = arith.extui %11 : vector<1x128xi1> to vector<1x128xi32>
    %13 = arith.sitofp %12 : vector<1x128xi32> to vector<1x128xf32>
    %cst = arith.constant dense<0xFF800000> : vector<128xf32>
    %14 = vector.multi_reduction <maximumf>, %3, %cst [0] : vector<4x128xf32> to vector<128xf32>
    %15 = vector.shape_cast %14 : vector<128xf32> to vector<1x128xf32>
    %16 = vector.broadcast %15 : vector<1x128xf32> to vector<4x128xf32>
    %17 = arith.subf %3, %16 : vector<4x128xf32>
    %18 = math.exp %17 : vector<4x128xf32>
    %cst_6 = arith.constant dense<0.000000e+00> : vector<128xf32>
    %19 = vector.multi_reduction <add>, %18, %cst_6 [0] : vector<4x128xf32> to vector<128xf32>
    %20 = vector.shape_cast %19 : vector<128xf32> to vector<1x128xf32>
    %21 = math.log %20 : vector<1x128xf32>
    %22 = tpu.iota {dimensions = array<i32: 0>} : vector<4x128xi32>
    %23 = vector.broadcast %4 : vector<1x128xi32> to vector<4x128xi32>
    %24 = arith.cmpi eq, %22, %23 : vector<4x128xi32>
    %25 = arith.extui %24 : vector<4x128xi1> to vector<4x128xi32>
    %26 = arith.sitofp %25 : vector<4x128xi32> to vector<4x128xf32>
    %27 = arith.mulf %26, %17 : vector<4x128xf32>
    %cst_7 = arith.constant dense<0.000000e+00> : vector<128xf32>
    %28 = vector.multi_reduction <add>, %27, %cst_7 [0] : vector<4x128xf32> to vector<128xf32>
    %29 = vector.shape_cast %28 : vector<128xf32> to vector<1x128xf32>
    %30 = arith.subf %21, %29 : vector<1x128xf32>
    %31 = vector.broadcast %5 : vector<4x1xf32> to vector<4x128xf32>
    %32 = arith.mulf %26, %31 : vector<4x128xf32>
    %cst_8 = arith.constant dense<0.000000e+00> : vector<128xf32>
    %33 = vector.multi_reduction <add>, %32, %cst_8 [0] : vector<4x128xf32> to vector<128xf32>
    %34 = vector.shape_cast %33 : vector<128xf32> to vector<1x128xf32>
    %35 = arith.mulf %34, %13 : vector<1x128xf32>
    %c0_9 = arith.constant 0 : index
    %c0_10 = arith.constant 0 : index
    %36 = vector.load %arg5[%c0_9, %c0_10] : memref<1x1xf32, #tpu.memory_space<vmem>>, vector<1x1xf32>
    %37 = arith.mulf %35, %30 : vector<1x128xf32>
    %cst_11 = arith.constant dense<0.000000e+00> : vector<1xf32>
    %38 = vector.multi_reduction <add>, %37, %cst_11 [1] : vector<1x128xf32> to vector<1xf32>
    %39 = vector.shape_cast %38 : vector<1xf32> to vector<1x1xf32>
    %40 = arith.addf %36, %39 : vector<1x1xf32>
    %c0_12 = arith.constant 0 : index
    %c0_13 = arith.constant 0 : index
    %41 = vector.load %arg5[%c0_12, %c0_13] : memref<1x1xf32, #tpu.memory_space<vmem>>, vector<1x1xf32>
    tpu.vector_store %arg5[%c0_12, %c0_13], %40 {strides = array<i32>} : memref<1x1xf32, #tpu.memory_space<vmem>>, vector<1x1xf32>,
    %c0_14 = arith.constant 0 : index
    %c0_15 = arith.constant 0 : index
    %42 = vector.load %arg6[%c0_14, %c0_15] : memref<1x1xf32, #tpu.memory_space<vmem>>, vector<1x1xf32>
    %cst_16 = arith.constant dense<0.000000e+00> : vector<1xf32>
    %43 = vector.multi_reduction <add>, %35, %cst_16 [1] : vector<1x128xf32> to vector<1xf32>
    %44 = vector.shape_cast %43 : vector<1xf32> to vector<1x1xf32>
    %45 = arith.addf %42, %44 : vector<1x1xf32>
    %c0_17 = arith.constant 0 : index
    %c0_18 = arith.constant 0 : index
    %46 = vector.load %arg6[%c0_17, %c0_18] : memref<1x1xf32, #tpu.memory_space<vmem>>, vector<1x1xf32>
    tpu.vector_store %arg6[%c0_17, %c0_18], %45 {strides = array<i32>} : memref<1x1xf32, #tpu.memory_space<vmem>>, vector<1x1xf32>,
    %c0_i32_19 = arith.constant 0 : i32
    %47 = arith.cmpi eq, %arg0, %c0_i32_19 : i32
    %48 = arith.extui %47 : i1 to i32
    %c0_i32_20 = arith.constant 0 : i32
    %49 = arith.cmpi ne, %48, %c0_i32_20 : i32
    scf.if %49 {
      %c0_21 = arith.constant 0 : index
      %c0_22 = arith.constant 0 : index
      %50 = vector.load %arg5[%c0_21, %c0_22] : memref<1x1xf32, #tpu.memory_space<vmem>>, vector<1x1xf32>
      %c0_23 = arith.constant 0 : index
      %c0_24 = arith.constant 0 : index
      %51 = vector.load %arg6[%c0_23, %c0_24] : memref<1x1xf32, #tpu.memory_space<vmem>>, vector<1x1xf32>
      %52 = arith.divf %50, %51 : vector<1x1xf32>
      %c0_25 = arith.constant 0 : index
      %c0_26 = arith.constant 0 : index
      %53 = vector.load %arg4[%c0_25, %c0_26] : memref<1x1xf32, #tpu.memory_space<vmem>>, vector<1x1xf32>
      tpu.vector_store %arg4[%c0_25, %c0_26], %52 {strides = array<i32>} : memref<1x1xf32, #tpu.memory_space<vmem>>, vector<1x1xf32>,
    } else {
    }
    return
  }
  func.func @transform_0(%arg0: i32) -> (i32, i32) {
    %c0_i32 = arith.constant 0 : i32
    %c0_i32_0 = arith.constant 0 : i32
    return %c0_i32, %arg0 : i32, i32
  }
  func.func @transform_1(%arg0: i32) -> (i32, i32) {
    %c0_i32 = arith.constant 0 : i32
    %c0_i32_0 = arith.constant 0 : i32
    return %c0_i32, %arg0 : i32, i32
  }
  func.func @transform_2(%arg0: i32) -> (i32, i32) {
    %c0_i32 = arith.constant 0 : i32
    %c0_i32_0 = arith.constant 0 : i32
    %c0_i32_1 = arith.constant 0 : i32
    return %c0_i32, %c0_i32_0 : i32, i32
  }
  func.func @transform_3(%arg0: i32) -> (i32, i32) {
    %c0_i32 = arith.constant 0 : i32
    %c0_i32_0 = arith.constant 0 : i32
    %c0_i32_1 = arith.constant 0 : i32
    return %c0_i32, %c0_i32_0 : i32, i32
  }
}

</mosaic_0001>

<llo_original>
// kernel: tpu_custom_call.1
$region0: #{tpu_custom_call.1}
  #allocation0 [shape = 'u32[]', space=smem, size = 0x4, offset = 0x4, fixed_abs, tag = 'smem constant byte address 0x4 - core index']
  #allocation1 [shape = 'u32[72,128]{1,0:T(1,128)}', space=vmem, size = 0x9000, scoped, tag = 'internal scratch']
  #allocation2 [shape = 'f32[1,1]{1,0:T(1,128)}', space=vmem, size = 0x200, scoped, tag = 'scratch operand']
  #allocation3 [shape = 'f32[1,1]{1,0:T(1,128)}', space=vmem, size = 0x200, scoped, tag = 'scratch operand']
  %s0 = inlined_call_operand.vmem [shape: f32[4,128], index: 0, kind: input, shape index: {}]
  %s1 = inlined_call_operand.vmem [shape: s32[1,128], index: 1, kind: input, shape index: {}]
  %s2 = inlined_call_operand.vmem [shape: f32[4,1], index: 2, kind: input, shape index: {}]
  %s3 = inlined_call_operand.hbm [shape: f32[1,1], index: 3, kind: output, shape index: {}]
  %s4 = sld [smem:[#allocation0]]
  $region30: #{tpu_custom_call.1} parent=0
    _
  %s6 = ssub.s32 1, %s4
  %s7 = scalar_select 0, %s6, %s4
  $region1: #{tpu_custom_call.1} parent=0
    #allocation4 [shape = 'u8[512]{0}', space=vmem, size = 0x400, scoped, tag = 'output window, operand 0, single buffered']
    #allocation5 [shape = 's32[1]{0}', space=sflag, size = 0x4, scoped, tag = 'scoped memory for tpu_custom_call.1']
    %8 = vsyncpa [#allocation5], 0
    // Predicated region
    $region2: #{tpu_custom_call.1} parent=1 // pred_check
      _
    $region3: #{tpu_custom_call.1} parent=1 // pred_check_branch
      %10 = sbr.rel (0) target = $region5
    $region4: #{tpu_custom_call.1} parent=1 // pred_region
      _
    $region5: #{tpu_custom_call.1} parent=1 // pred_fallthru
      _
    // Predicated region
    $region6: #{tpu_custom_call.1} parent=1 // pred_check
      _
    $region7: #{tpu_custom_call.1} parent=1 // pred_check_branch
      %12 = sbr.rel (0) target = $region9
    $region8: #{tpu_custom_call.1} parent=1 // pred_region
      _
    $region9: #{tpu_custom_call.1} parent=1 // pred_fallthru
      _
    // Predicated region
    $region10: #{tpu_custom_call.1} parent=1 // pred_check
      _
    $region11: #{tpu_custom_call.1} parent=1 // pred_check_branch
      %14 = sbr.rel (0) target = $region13
    $region12: #{tpu_custom_call.1} parent=1 // pred_region
      _
    $region13: #{tpu_custom_call.1} parent=1 // pred_fallthru
      _
    %p15 = scmp.eq.s32.totalorder 0, 0
    // Predicated region
    $region14: #{tpu_custom_call.1} parent=1 // pred_check
      %p16 = pneg %p15
    $region15: #{tpu_custom_call.1} parent=1 // pred_check_branch
      %18 = sbr.rel (%p16) target = $region17
    $region16: #{tpu_custom_call.1} parent=1 // pred_region
      %vm19 = vcmask 0
      %20 = vst.msk [vmem:[#allocation2] sm:$0x1] %vm19, 0.0
      %21 = vst.msk [vmem:[#allocation3] sm:$0x1] %vm19, 0.0
    $region17: #{tpu_custom_call.1} parent=1 // pred_fallthru
      _
    %v22 = vld [vmem:[%s0] sm:$0xf]
    %v23 = vld [vmem:[%s1] sm:$0x1]
    %v24 = vld [vmem:[%s2] sm:$0xf]
    %v25 = vlaneseq
    %v26 = vand.u32 %v25, 127
    %s27 = smul.u32 0, 128
    %v28 = vstv %s27
    %v29 = vadd.s32 %v28, %v26
    %vm30 = vcmp.lt.s32.totalorder %v29, 8
    %v31 = vsel %vm30, 1, 0
    %v32 = vcvt.s32.f32 %v31
    %vm33 = vcmask 1043456
    %v34 = vsel %vm33, %v22, -inf
    %v35 = vrot.slane %v34, 4
    %v36 = vmax.f32 %v34, %v35
    %v37 = vrot.slane %v36, 2
    %v38 = vmax.f32 %v36, %v37
    %v39 = vrot.slane %v38, 1
    %v40 = vmax.f32 %v38, %v39
    %v41 = vsub.f32 %v22, %v40
    %v42 = vmul.f32 %v41, 1.442695
    %v43 = vpow.pop %v42
    %v44 = vsel %vm33, %v43, 0.0
    %v45 = vrot.slane %v44, 4
    %v46 = vadd.f32 %v44, %v45
    %v47 = vrot.slane %v46, 2
    %v48 = vadd.f32 %v46, %v47
    %v49 = vrot.slane %v48, 1
    %v50 = vadd.f32 %v48, %v49
    %v51 = vlog2.pop %v50
    %v52 = vmul.f32 %v51, 0.6931472
    %v53 = vlaneseq
    %v54 = vshrl.u32 %v53, 7
    %v55 = vperm.slane %v23, 0
    %vm56 = vcmp.eq.s32.totalorder %v54, %v55
    %v57 = vsel %vm56, 1, 0
    %v58 = vcvt.s32.f32 %v57
    %v59 = vmul.f32 %v58, %v41
    %v60 = vsel %vm33, %v59, 0.0
    %v61 = vrot.slane %v60, 4
    %v62 = vadd.f32 %v60, %v61
    %v63 = vrot.slane %v62, 2
    %v64 = vadd.f32 %v62, %v63
    %v65 = vrot.slane %v64, 1
    %v66 = vadd.f32 %v64, %v65
    %v67 = vsub.f32 %v52, %v66
    %69 = vset.pattern.permute.xlu0 0
    %70 = vperm.xlu0 %69, %v24
    %v71 = vpop.permute.xlu0 %70
    %v73 = vmul.f32 %v58, %v71
    %v74 = vsel %vm33, %v73, 0.0
    %v75 = vrot.slane %v74, 4
    %v76 = vadd.f32 %v74, %v75
    %v77 = vrot.slane %v76, 2
    %v78 = vadd.f32 %v76, %v77
    %v79 = vrot.slane %v78, 1
    %v80 = vadd.f32 %v78, %v79
    %v81 = vmul.f32 %v80, %v32
    %v82 = vld [vmem:[#allocation2] sm:$0x1]
    %v83 = vmul.f32 %v81, %v67
    %84 = vadd.xlane.f32.xlu0 %v83
    %v85 = vpop.xlane.xlu0 %84
    %v86 = vadd.f32 %v82, %v85
    %vm87 = vcmask 0
    %88 = vst.msk [vmem:[#allocation2] sm:$0x1] %vm87, %v86
    %v89 = vld [vmem:[#allocation3] sm:$0x1]
    %90 = vadd.xlane.f32.xlu0 %v81
    %v91 = vpop.xlane.xlu0 %90
    %v92 = vadd.f32 %v89, %v91
    %93 = vst.msk [vmem:[#allocation3] sm:$0x1] %vm87, %v92
    // Predicated region
    $region18: #{tpu_custom_call.1} parent=1 // pred_check
      %p94 = pneg %p15
    $region19: #{tpu_custom_call.1} parent=1 // pred_check_branch
      %96 = sbr.rel (%p94) target = $region21
    $region20: #{tpu_custom_call.1} parent=1 // pred_region
      %v97 = vld [vmem:[#allocation2] sm:$0x1]
      %v98 = vld [vmem:[#allocation3] sm:$0x1]
      %v99 = vrcp.pop %v98
      %v100 = vmul.f32 %v98, %v99
      %v101 = vsub.f32 1.0, %v100
      %v102 = vmul.f32 %v99, %v101
      %v103 = vadd.f32 %v99, %v102
      %vm104 = vweird.f32 %v98
      %vm105 = vweird.f32 %v99
      %vm106 = vmor %vm104, %vm105
      %v107 = vsel %vm106, %v99, %v103
      %v108 = vand.u32 2147483647, %v98
      %vm109 = vcmp.eq.f32.partialorder %v108, 8.507059e+37
      %v110 = vand.u32 %v98, 2147483648
      %v111 = vor.u32 1.1754944e-38, %v110
      %v112 = vsel %vm109, %v111, %v107
      %v113 = vmul.f32 %v97, %v112
      %114 = vst.msk [vmem:[#allocation4] sm:$0x1] %vm87, %v113
    $region21: #{tpu_custom_call.1} parent=1 // pred_fallthru
      _
    // Predicated region
    $region22: #{tpu_custom_call.1} parent=1 // pred_check
      _
    $region23: #{tpu_custom_call.1} parent=1 // pred_check_branch
      %116 = sbr.rel (0) target = $region25
    $region24: #{tpu_custom_call.1} parent=1 // pred_region
      %118 = vsyncadd [#allocation5], 0
      %s120 = sshll.u32 [#allocation4], 4
      %s121 = int_to_ptr.vmem [resolvable:$true] %s120
      %s122 = sshll.u32 %s3, 4
      %s123 = int_to_ptr.hbm [resolvable:$true] %s122
      %125 = dma.vmem_to_hbm [thread:$0]  %s121, 16, %s123, [#allocation5]
    $region25: #{tpu_custom_call.1} parent=1 // pred_fallthru
      _
    // Predicated region
    $region26: #{tpu_custom_call.1} parent=1 // pred_check
      _
    $region27: #{tpu_custom_call.1} parent=1 // pred_check_branch
      %127 = sbr.rel (0) target = $region29
    $region28: #{tpu_custom_call.1} parent=1 // pred_region
      %129 = dma.done [#allocation5], 16
    $region29: #{tpu_custom_call.1} parent=1 // pred_fallthru
      _
    %130 = vsyncpa [#allocation5], 1

</llo_original>
